<compile_context>
chip_gen: v7x
topology: tpu7x:2x2x1
jax: 0.10.0
libtpu: 0.0.40
codegen_flags: <defaults>
</compile_context>

<pallas_src>
import functools

import jax
import jax.numpy as jnp
from jax import lax
from jax.experimental import pallas as pl
from jax.experimental.pallas import tpu as pltpu


def _round_up(x: int, m: int) -> int:
    return (x + m - 1) // m * m


def _make_distill_kernel(distillation_type: str, tau: float, total_b: int, tile_b: int):
    """Build the fused distillation-loss kernel (flavour fixed at trace time)."""
    is_soft = distillation_type == "soft"
    inv_b = 1.0 / float(total_b)
    inv_t = 1.0 / float(tau)

    def kernel(x_ref, w_ref, b_ref, logits_ref, lab_ref, part_ref):
        x = x_ref[...]                                   # (TB, D) f32
        w = w_ref[...]                                   # (D, C)  f32 (resident)
        b = b_ref[...].astype(jnp.float32)               # (1, C)
        logits_s = logits_ref[...].astype(jnp.float32)   # (TB, C) student logits
        lab = lab_ref[...]                               # (TB, 1) i32

        blk_b, c = logits_s.shape

        # ---- teacher forward: bf16 operands on the MXU, f32 accumulation ----
        teacher = jnp.dot(x.astype(jnp.bfloat16), w.astype(jnp.bfloat16),
                          preferred_element_type=jnp.float32) + b        # (TB, C)

        col = lax.broadcasted_iota(jnp.int32, (blk_b, c), 1)
        row = lax.broadcasted_iota(jnp.int32, (blk_b, 1), 0)
        g_row = pl.program_id(0) * tile_b + row
        mask = (g_row < total_b).astype(jnp.float32)                     # (TB, 1)

        # ---- base criterion: mean cross-entropy(student logits, labels) ----
        m = jnp.max(logits_s, axis=1, keepdims=True)
        e = jnp.exp(logits_s - m)
        lse = m + jnp.log(jnp.sum(e, axis=1, keepdims=True))             # (TB, 1)
        onehot = (col == lab).astype(jnp.float32)
        picked = jnp.sum(onehot * logits_s, axis=1, keepdims=True)       # (TB, 1)
        ce = (lse - picked) * mask
        base_partial = jnp.sum(ce) * inv_b

        if is_soft:
            # F.kl_div(log_softmax(out/T), log_softmax(teacher/T),
            #          reduction='sum', log_target=True) * T*T / numel
            # Reuse exponentials; multiply by reciprocals instead of dividing.
            s = logits_s * inv_t
            t = teacher * inv_t
            ms = jnp.max(s, axis=1, keepdims=True)
            es = jnp.exp(s - ms)
            zs = jnp.sum(es, axis=1, keepdims=True)
            log_p_s = (s - ms) - jnp.log(zs)
            mt = jnp.max(t, axis=1, keepdims=True)
            et = jnp.exp(t - mt)
            zt = jnp.sum(et, axis=1, keepdims=True)
            log_p_t = (t - mt) - jnp.log(zt)
            p_t = et * pl.reciprocal(zt, approx=True)
            kl_row = jnp.sum(p_t * (log_p_t - log_p_s), axis=1, keepdims=True)
            kd_scale = (tau * tau) * inv_b / c            # python const at trace
            kd_partial = jnp.sum(kl_row * mask) * kd_scale
        else:
            # hard: cross_entropy(outputs, teacher.argmax(dim=1)), mean reduction
            # (first-index tie-break, matching torch.argmax)
            tmax = jnp.max(teacher, axis=1, keepdims=True)
            argmax = jnp.min(jnp.where(teacher == tmax, col, c),
                             axis=1, keepdims=True)                      # (TB, 1)
            onehot_t = (col == argmax).astype(jnp.float32)
            picked_t = jnp.sum(onehot_t * logits_s, axis=1, keepdims=True)
            kd_partial = jnp.sum((lse - picked_t) * mask) * inv_b

        # lane-dense (1, 1, 128) partial-sum slab: lane 0 = base, lane 1 = kd
        lane = lax.broadcasted_iota(jnp.int32, (1, 128), 1)
        vals = (jnp.where(lane == 0, base_partial, 0.0)
                + jnp.where(lane == 1, kd_partial, 0.0))
        part_ref[...] = vals[None].astype(jnp.float32)

    return kernel


@functools.partial(jax.jit,
                   static_argnames=("distillation_type", "alpha", "tau", "block_b"))
def distillation_loss(inputs, outputs, labels, teacher_w, teacher_b, *,
                      distillation_type="soft", alpha=0.5, tau=2.0, block_b=128):
    """Returns dict(base_loss, kd_loss, loss) — mirrors DistillationLoss.forward."""
    # TODO(synk): distillation_type == 'none' simply returns the base-criterion
    # result and is handled outside this fused kernel.
    assert distillation_type in ("soft", "hard")

    B, D = inputs.shape
    _, C = outputs.shape

    # Batch tile: multiple of 8 sublanes, capped by block_b (budget vs VMEM).
    tb = _round_up(min(int(block_b), _round_up(B, 8)), 8)
    num_tiles = pl.cdiv(B, tb)
    bp = num_tiles * tb
    if bp != B:
        pad = bp - B
        inputs = jnp.pad(inputs, ((0, pad), (0, 0)))
        outputs = jnp.pad(outputs, ((0, pad), (0, 0)))
        labels = jnp.pad(labels, ((0, pad), (0, 0)))

    kernel = _make_distill_kernel(distillation_type, float(tau), B, tb)

    # VMEM budget: double-buffered batch tiles + resident W/b + partial slabs.
    vmem_bytes = 4 * (2 * tb * (D + C + 1) + D * C + C + 2 * 128)
    vmem_limit = int(min(64 * 2**20, max(4 * vmem_bytes, 8 * 2**20)))

    n_trans = (4 if distillation_type == "soft" else 1) * bp * C
    cost = pl.CostEstimate(
        flops=2 * bp * D * C,
        transcendentals=n_trans,
        bytes_accessed=4 * (bp * (D + C + 1) + D * C + C + num_tiles * 128))

    partials = pl.pallas_call(
        kernel,
        out_shape=jax.ShapeDtypeStruct((num_tiles, 1, 128), jnp.float32),
        grid=(num_tiles,),
        in_specs=[
            pl.BlockSpec((tb, D), lambda i: (i, 0)),     # inputs  (batch-tiled)
            pl.BlockSpec((D, C), lambda i: (0, 0)),      # teacher W (resident)
            pl.BlockSpec((1, C), lambda i: (0, 0)),      # teacher b (resident)
            pl.BlockSpec((tb, C), lambda i: (i, 0)),     # student logits
            pl.BlockSpec((tb, 1), lambda i: (i, 0)),     # labels
        ],
        out_specs=pl.BlockSpec((1, 1, 128), lambda i: (i, 0, 0)),
        compiler_params=pltpu.CompilerParams(
            dimension_semantics=("parallel",),
            vmem_limit_bytes=vmem_limit),
        cost_estimate=cost,
    )(inputs, teacher_w, teacher_b, outputs, labels)

    base = jnp.sum(partials[:, 0, 0])
    kd = jnp.sum(partials[:, 0, 1])
    loss = base * (1.0 - alpha) + kd * alpha
    return {"base_loss": base, "kd_loss": kd, "loss": loss}


def _reference(inputs, outputs, labels, w, b, distillation_type, alpha, tau):
    """Plain-JAX reference (same bf16-operand teacher matmul policy as the kernel)."""
    teacher = jnp.dot(inputs.astype(jnp.bfloat16), w.astype(jnp.bfloat16),
                      preferred_element_type=jnp.float32) + b
    logp = jax.nn.log_softmax(outputs, axis=1)
    base = -jnp.mean(jnp.take_along_axis(logp, labels, axis=1))
    if distillation_type == "soft":
        T = tau
        ls = jax.nn.log_softmax(outputs / T, axis=1)
        lt = jax.nn.log_softmax(teacher / T, axis=1)
        kd = jnp.sum(jnp.exp(lt) * (lt - ls)) * (T * T) / outputs.size
    else:
        t_idx = jnp.argmax(teacher, axis=1, keepdims=True)
        kd = -jnp.mean(jnp.take_along_axis(logp, t_idx, axis=1))
    return base, kd, base * (1 - alpha) + kd * alpha


if __name__ == "__main__":
    B, D, C = 24, 32, 16
    alpha, tau = 0.5, 2.0

    key = jax.random.PRNGKey(0)
    k_in, k_out, k_lab, k_w, k_b = jax.random.split(key, 5)

    inputs = jax.random.normal(k_in, (B, D), dtype=jnp.float32)
    outputs = jax.random.normal(k_out, (B, C), dtype=jnp.float32)   # student logits
    labels = jax.random.randint(k_lab, (B, 1), 0, C, dtype=jnp.int32)
    # deterministic synthetic teacher (linear D -> C)
    teacher_w = 0.1 * jax.random.normal(k_w, (D, C), dtype=jnp.float32)
    teacher_b = 0.01 * jax.random.normal(k_b, (1, C), dtype=jnp.float32)

    ok = True
    for dist_type in ("soft", "hard"):
        for tb in (16, 128):   # multi-tile (masked last tile) and single-tile paths
            res = distillation_loss(inputs, outputs, labels, teacher_w, teacher_b,
                                    distillation_type=dist_type, alpha=alpha,
                                    tau=tau, block_b=tb)
            jax.block_until_ready(res)

            rb, rkd, rl = _reference(inputs, outputs, labels, teacher_w, teacher_b,
                                     dist_type, alpha, tau)
            ok &= bool(jnp.allclose(res["base_loss"], rb, rtol=2e-3, atol=2e-3))
            ok &= bool(jnp.allclose(res["kd_loss"], rkd, rtol=2e-3, atol=2e-3))
            ok &= bool(jnp.allclose(res["loss"], rl, rtol=2e-3, atol=2e-3))

    print("KERNEL_OK" if ok else "KERNEL_MISMATCH")
</pallas_src>

<mosaic_0001>
module attributes {stable_mosaic.version = 11 : i64} {
  func.func @kernel(%arg0: i32, %arg1: memref<16x32xf32, #tpu.memory_space<vmem>>, %arg2: memref<32x16xf32, #tpu.memory_space<vmem>>, %arg3: memref<1x16xf32, #tpu.memory_space<vmem>>, %arg4: memref<16x16xf32, #tpu.memory_space<vmem>>, %arg5: memref<16x1xi32, #tpu.memory_space<vmem>>, %arg6: memref<1x1x128xf32, #tpu.memory_space<vmem>>) attributes {dimension_semantics = [#tpu.dimension_semantics<parallel>], iteration_bounds = array<i64: 2>, scalar_prefetch = 0 : i64, scratch_operands = 0 : i64, tpu.core_type = #tpu.core_type<tc>, window_params = [{transform_indices = @transform_0, window_bounds = array<i64: 16, 32>}, {pipeline_mode = #tpu.pipeline_mode<synchronous>, transform_indices = @transform_1, window_bounds = array<i64: 32, 16>}, {pipeline_mode = #tpu.pipeline_mode<synchronous>, transform_indices = @transform_2, window_bounds = array<i64: 1, 16>}, {transform_indices = @transform_3, window_bounds = array<i64: 16, 16>}, {transform_indices = @transform_4, window_bounds = array<i64: 16, 1>}, {transform_indices = @transform_5, window_bounds = array<i64: 1, 1, 128>}]} {
    %c0 = arith.constant 0 : index
    %c0_0 = arith.constant 0 : index
    %0 = vector.load %arg1[%c0, %c0_0] : memref<16x32xf32, #tpu.memory_space<vmem>>, vector<16x32xf32>
    %c0_1 = arith.constant 0 : index
    %c0_2 = arith.constant 0 : index
    %1 = vector.load %arg2[%c0_1, %c0_2] : memref<32x16xf32, #tpu.memory_space<vmem>>, vector<32x16xf32>
    %c0_3 = arith.constant 0 : index
    %c0_4 = arith.constant 0 : index
    %2 = vector.load %arg3[%c0_3, %c0_4] : memref<1x16xf32, #tpu.memory_space<vmem>>, vector<1x16xf32>
    %c0_5 = arith.constant 0 : index
    %c0_6 = arith.constant 0 : index
    %3 = vector.load %arg4[%c0_5, %c0_6] : memref<16x16xf32, #tpu.memory_space<vmem>>, vector<16x16xf32>
    %c0_7 = arith.constant 0 : index
    %c0_8 = arith.constant 0 : index
    %4 = vector.load %arg5[%c0_7, %c0_8] : memref<16x1xi32, #tpu.memory_space<vmem>>, vector<16x1xi32>
    %5 = arith.truncf %0 : vector<16x32xf32> to vector<16x32xbf16>
    %6 = arith.truncf %1 : vector<32x16xf32> to vector<32x16xbf16>
    %cst = arith.constant dense<0.000000e+00> : vector<16x16xf32>
    %7 = tpu.matmul %5, %6, %cst {dimension_numbers = #tpu.dot_dimension_numbers<[1], [0], [0], [1], [0, 0, 1, 1], [], []>} : vector<16x32xbf16>, vector<32x16xbf16>, vector<16x16xf32> -> vector<16x16xf32>
    %8 = vector.broadcast %2 : vector<1x16xf32> to vector<16x16xf32>
    %9 = arith.addf %7, %8 : vector<16x16xf32>
    %10 = tpu.iota {dimensions = array<i32: 1>} : vector<16x16xi32>
    %11 = tpu.iota {dimensions = array<i32: 0>} : vector<16x1xi32>
    %c16_i32 = arith.constant 16 : i32
    %12 = arith.muli %arg0, %c16_i32 : i32
    %13 = vector.broadcast %12 : i32 to vector<16x1xi32>
    %14 = arith.addi %13, %11 : vector<16x1xi32>
    %c24_i32 = arith.constant 24 : i32
    %15 = vector.broadcast %c24_i32 : i32 to vector<16x1xi32>
    %16 = arith.cmpi slt, %14, %15 : vector<16x1xi32>
    %17 = arith.extui %16 : vector<16x1xi1> to vector<16x1xi32>
    %18 = arith.sitofp %17 : vector<16x1xi32> to vector<16x1xf32>
    %cst_9 = arith.constant dense<0xFF800000> : vector<16xf32>
    %19 = vector.multi_reduction <maximumf>, %3, %cst_9 [1] : vector<16x16xf32> to vector<16xf32>
    %20 = vector.shape_cast %19 : vector<16xf32> to vector<16x1xf32>
    %21 = vector.broadcast %20 : vector<16x1xf32> to vector<16x16xf32>
    %22 = arith.subf %3, %21 : vector<16x16xf32>
    %23 = math.exp %22 : vector<16x16xf32>
    %cst_10 = arith.constant dense<0.000000e+00> : vector<16xf32>
    %24 = vector.multi_reduction <add>, %23, %cst_10 [1] : vector<16x16xf32> to vector<16xf32>
    %25 = vector.shape_cast %24 : vector<16xf32> to vector<16x1xf32>
    %26 = math.log %25 : vector<16x1xf32>
    %27 = arith.addf %20, %26 : vector<16x1xf32>
    %28 = vector.broadcast %4 : vector<16x1xi32> to vector<16x16xi32>
    %29 = arith.cmpi eq, %10, %28 : vector<16x16xi32>
    %30 = arith.extui %29 : vector<16x16xi1> to vector<16x16xi32>
    %31 = arith.sitofp %30 : vector<16x16xi32> to vector<16x16xf32>
    %32 = arith.mulf %31, %3 : vector<16x16xf32>
    %cst_11 = arith.constant dense<0.000000e+00> : vector<16xf32>
    %33 = vector.multi_reduction <add>, %32, %cst_11 [1] : vector<16x16xf32> to vector<16xf32>
    %34 = vector.shape_cast %33 : vector<16xf32> to vector<16x1xf32>
    %35 = arith.subf %27, %34 : vector<16x1xf32>
    %36 = arith.mulf %35, %18 : vector<16x1xf32>
    %37 = vector.shape_cast %36 : vector<16x1xf32> to vector<1x16x1xf32>
    %cst_12 = arith.constant dense<0.000000e+00> : vector<1xf32>
    %38 = vector.multi_reduction <add>, %37, %cst_12 [1, 2] : vector<1x16x1xf32> to vector<1xf32>
    %39 = vector.shape_cast %38 : vector<1xf32> to vector<1x1x1xf32>
    %40 = vector.extract %39[0, 0, 0] : f32 from vector<1x1x1xf32>
    %cst_13 = arith.constant 0.0416666679 : f32
    %41 = arith.mulf %40, %cst_13 : f32
    %cst_14 = arith.constant 5.000000e-01 : f32
    %42 = vector.broadcast %cst_14 : f32 to vector<16x16xf32>
    %43 = arith.mulf %3, %42 : vector<16x16xf32>
    %cst_15 = arith.constant 5.000000e-01 : f32
    %44 = vector.broadcast %cst_15 : f32 to vector<16x16xf32>
    %45 = arith.mulf %9, %44 : vector<16x16xf32>
    %cst_16 = arith.constant dense<0xFF800000> : vector<16xf32>
    %46 = vector.multi_reduction <maximumf>, %43, %cst_16 [1] : vector<16x16xf32> to vector<16xf32>
    %47 = vector.shape_cast %46 : vector<16xf32> to vector<16x1xf32>
    %48 = vector.broadcast %47 : vector<16x1xf32> to vector<16x16xf32>
    %49 = arith.subf %43, %48 : vector<16x16xf32>
    %50 = math.exp %49 : vector<16x16xf32>
    %cst_17 = arith.constant dense<0.000000e+00> : vector<16xf32>
    %51 = vector.multi_reduction <add>, %50, %cst_17 [1] : vector<16x16xf32> to vector<16xf32>
    %52 = vector.shape_cast %51 : vector<16xf32> to vector<16x1xf32>
    %53 = vector.broadcast %47 : vector<16x1xf32> to vector<16x16xf32>
    %54 = arith.subf %43, %53 : vector<16x16xf32>
    %55 = math.log %52 : vector<16x1xf32>
    %56 = vector.broadcast %55 : vector<16x1xf32> to vector<16x16xf32>
    %57 = arith.subf %54, %56 : vector<16x16xf32>
    %cst_18 = arith.constant dense<0xFF800000> : vector<16xf32>
    %58 = vector.multi_reduction <maximumf>, %45, %cst_18 [1] : vector<16x16xf32> to vector<16xf32>
    %59 = vector.shape_cast %58 : vector<16xf32> to vector<16x1xf32>
    %60 = vector.broadcast %59 : vector<16x1xf32> to vector<16x16xf32>
    %61 = arith.subf %45, %60 : vector<16x16xf32>
    %62 = math.exp %61 : vector<16x16xf32>
    %cst_19 = arith.constant dense<0.000000e+00> : vector<16xf32>
    %63 = vector.multi_reduction <add>, %62, %cst_19 [1] : vector<16x16xf32> to vector<16xf32>
    %64 = vector.shape_cast %63 : vector<16xf32> to vector<16x1xf32>
    %65 = vector.broadcast %59 : vector<16x1xf32> to vector<16x16xf32>
    %66 = arith.subf %45, %65 : vector<16x16xf32>
    %67 = math.log %64 : vector<16x1xf32>
    %68 = vector.broadcast %67 : vector<16x1xf32> to vector<16x16xf32>
    %69 = arith.subf %66, %68 : vector<16x16xf32>
    %70 = tpu.reciprocal %64 {approx = true} : vector<16x1xf32> -> vector<16x1xf32>
    %71 = vector.broadcast %70 : vector<16x1xf32> to vector<16x16xf32>
    %72 = arith.mulf %62, %71 : vector<16x16xf32>
    %73 = arith.subf %69, %57 : vector<16x16xf32>
    %74 = arith.mulf %72, %73 : vector<16x16xf32>
    %cst_20 = arith.constant dense<0.000000e+00> : vector<16xf32>
    %75 = vector.multi_reduction <add>, %74, %cst_20 [1] : vector<16x16xf32> to vector<16xf32>
    %76 = vector.shape_cast %75 : vector<16xf32> to vector<16x1xf32>
    %77 = arith.mulf %76, %18 : vector<16x1xf32>
    %78 = vector.shape_cast %77 : vector<16x1xf32> to vector<1x16x1xf32>
    %cst_21 = arith.constant dense<0.000000e+00> : vector<1xf32>
    %79 = vector.multi_reduction <add>, %78, %cst_21 [1, 2] : vector<1x16x1xf32> to vector<1xf32>
    %80 = vector.shape_cast %79 : vector<1xf32> to vector<1x1x1xf32>
    %81 = vector.extract %80[0, 0, 0] : f32 from vector<1x1x1xf32>
    %cst_22 = arith.constant 0.010416667 : f32
    %82 = arith.mulf %81, %cst_22 : f32
    %83 = tpu.iota {dimensions = array<i32: 1>} : vector<1x128xi32>
    %c0_i32 = arith.constant 0 : i32
    %84 = vector.broadcast %c0_i32 : i32 to vector<1x128xi32>
    %85 = arith.cmpi eq, %83, %84 : vector<1x128xi32>
    %cst_23 = arith.constant 0.000000e+00 : f32
    %86 = vector.broadcast %41 : f32 to vector<1x128xf32>
    %87 = vector.broadcast %cst_23 : f32 to vector<1x128xf32>
    %88 = arith.select %85, %86, %87 : vector<1x128xi1>, vector<1x128xf32>
    %c1_i32 = arith.constant 1 : i32
    %89 = vector.broadcast %c1_i32 : i32 to vector<1x128xi32>
    %90 = arith.cmpi eq, %83, %89 : vector<1x128xi32>
    %cst_24 = arith.constant 0.000000e+00 : f32
    %91 = vector.broadcast %82 : f32 to vector<1x128xf32>
    %92 = vector.broadcast %cst_24 : f32 to vector<1x128xf32>
    %93 = arith.select %90, %91, %92 : vector<1x128xi1>, vector<1x128xf32>
    %94 = arith.addf %88, %93 : vector<1x128xf32>
    %95 = vector.shape_cast %94 : vector<1x128xf32> to vector<1x1x128xf32>
    %c0_25 = arith.constant 0 : index
    %c0_26 = arith.constant 0 : index
    %c0_27 = arith.constant 0 : index
    %96 = vector.load %arg6[%c0_25, %c0_26, %c0_27] : memref<1x1x128xf32, #tpu.memory_space<vmem>>, vector<1x1x128xf32>
    tpu.vector_store %arg6[%c0_25, %c0_26, %c0_27], %95 {strides = array<i32>} : memref<1x1x128xf32, #tpu.memory_space<vmem>>, vector<1x1x128xf32>,
    return
  }
  func.func @transform_0(%arg0: i32) -> (i32, i32) {
    %c0_i32 = arith.constant 0 : i32
    %c0_i32_0 = arith.constant 0 : i32
    return %arg0, %c0_i32 : i32, i32
  }
  func.func @transform_1(%arg0: i32) -> (i32, i32) {
    %c0_i32 = arith.constant 0 : i32
    %c0_i32_0 = arith.constant 0 : i32
    %c0_i32_1 = arith.constant 0 : i32
    return %c0_i32, %c0_i32_0 : i32, i32
  }
  func.func @transform_2(%arg0: i32) -> (i32, i32) {
    %c0_i32 = arith.constant 0 : i32
    %c0_i32_0 = arith.constant 0 : i32
    %c0_i32_1 = arith.constant 0 : i32
    return %c0_i32, %c0_i32_0 : i32, i32
  }
  func.func @transform_3(%arg0: i32) -> (i32, i32) {
    %c0_i32 = arith.constant 0 : i32
    %c0_i32_0 = arith.constant 0 : i32
    return %arg0, %c0_i32 : i32, i32
  }
  func.func @transform_4(%arg0: i32) -> (i32, i32) {
    %c0_i32 = arith.constant 0 : i32
    %c0_i32_0 = arith.constant 0 : i32
    return %arg0, %c0_i32 : i32, i32
  }
  func.func @transform_5(%arg0: i32) -> (i32, i32, i32) {
    %c0_i32 = arith.constant 0 : i32
    %c0_i32_0 = arith.constant 0 : i32
    %c0_i32_1 = arith.constant 0 : i32
    return %arg0, %c0_i32, %c0_i32_0 : i32, i32, i32
  }
}

</mosaic_0001>

<llo_original>
// kernel: distillation_loss.1
$region0: #{distillation_loss.1}
  #allocation0 [shape = 'u32[]', space=smem, size = 0x4, offset = 0x4, fixed_abs, tag = 'smem constant byte address 0x4 - core index']
  #allocation1 [shape = 'u32[144,128]{1,0:T(1,128)}', space=vmem, size = 0x12000, scoped, tag = 'internal scratch']
  %s0 = inlined_call_operand.vmem [shape: f32[32,32], index: 0, kind: input, shape index: {}]
  %s1 = inlined_call_operand.vmem [shape: f32[32,16], index: 1, kind: input, shape index: {}]
  %s2 = inlined_call_operand.vmem [shape: f32[1,16], index: 2, kind: input, shape index: {}]
  %s3 = inlined_call_operand.vmem [shape: f32[32,16], index: 3, kind: input, shape index: {}]
  %s4 = inlined_call_operand.vmem [shape: s32[32,1], index: 4, kind: input, shape index: {}]
  %s5 = inlined_call_operand.vmem [shape: f32[2,1,128], index: 5, kind: output, shape index: {}]
  %s6 = sld [smem:[#allocation0]]
  $region53: #{distillation_loss.1} parent=0
    _
  %s8 = ssub.s32 1, %s6
  %s9 = scalar_select 0, %s8, %s6
  loop: start=0, step=1, limit=4
  $region2: #{distillation_loss.1} parent=0 // loop_pre_header
    _
  $region3: #{distillation_loss.1} parent=0 // loop_header
    %s11 = sphi 0, %s15
    %p12 = scmp.ge.s32.totalorder %s11, 4
    %s21 = sphi 0, %s23
    %s24 = sphi 0, %s21
    %s25 = sphi 0, %s24
    %s41 = sphi 0, %s25
    %s45 = sphi 0, %s45
    %s47 = sphi 0, %s45
    %s48 = sphi 0, %s47
    %s62 = sphi 0, %s48
    %s66 = sphi 0, %s66
    %s68 = sphi 0, %s66
    %s69 = sphi 0, %s68
    %s83 = sphi 0, %s69
    %s89 = sphi 0, %s91
    %s92 = sphi 0, %s89
    %s93 = sphi 0, %s92
    %s109 = sphi 0, %s93
    %s115 = sphi 0, %s117
    %s118 = sphi 0, %s115
    %s119 = sphi 0, %s118
    %s135 = sphi 0, %s119
    %s141 = sphi 0, %s143
    %s144 = sphi 0, %s141
    %s145 = sphi 0, %s144
    %s161 = sphi 0, %s145
  $region4: #{distillation_loss.1} parent=0 // loop_header_branch
    %14 = sbr.rel (%p12) target = $region8
  $region5: #{distillation_loss.1} parent=0 // loop_body
    %s16 = ssub.s32 %s11, 1
    %s17 = ssub.s32 %s11, 2
    %s18 = sadd.s32 %s11, 1
    %s19 = ssub.s32 %s11, %s18
    %p20 = scmp.eq.s32.totalorder %s19, 0
    %s22 = sadd.s32 %s21, 1
    %s23 = scalar_select %p20, %s21, %s22
    %p26 = pneg %p20
    %p27 = scmp.eq.s32.totalorder %s11, 1
    %p28 = por %p26, %p27
    %p29 = scmp.ne.s32.totalorder %s21, %s24
    %p30 = scmp.eq.s32.totalorder %s11, 0
    %p31 = por %p29, %p30
    %p32 = scmp.ne.s32.totalorder %s21, %s24
    %p33 = scmp.eq.s32.totalorder %s16, 1
    %p34 = por %p32, %p33
    %p35 = scmp.ne.s32.totalorder %s24, %s25
    %p36 = scmp.eq.s32.totalorder %s16, 0
    %p37 = por %p35, %p36
    %p38 = scmp.ne.s32.totalorder %s24, %s25
    %p39 = scmp.eq.s32.totalorder %s17, 1
    %p40 = por %p38, %p39
    %p42 = scmp.ne.s32.totalorder %s25, %s41
    %p43 = scmp.eq.s32.totalorder %s17, 0
    %p44 = por %p42, %p43
    %s46 = sadd.s32 %s45, 1
    %p49 = scmp.eq.s32.totalorder %s11, 1
    %p50 = scmp.ne.s32.totalorder %s45, %s47
    %p51 = scmp.eq.s32.totalorder %s11, 0
    %p52 = por %p50, %p51
    %p53 = scmp.ne.s32.totalorder %s45, %s47
    %p54 = scmp.eq.s32.totalorder %s16, 1
    %p55 = por %p53, %p54
    %p56 = scmp.ne.s32.totalorder %s47, %s48
    %p57 = scmp.eq.s32.totalorder %s16, 0
    %p58 = por %p56, %p57
    %p59 = scmp.ne.s32.totalorder %s47, %s48
    %p60 = scmp.eq.s32.totalorder %s17, 1
    %p61 = por %p59, %p60
    %p63 = scmp.ne.s32.totalorder %s48, %s62
    %p64 = scmp.eq.s32.totalorder %s17, 0
    %p65 = por %p63, %p64
    %s67 = sadd.s32 %s66, 1
    %p70 = scmp.eq.s32.totalorder %s11, 1
    %p71 = scmp.ne.s32.totalorder %s66, %s68
    %p72 = scmp.eq.s32.totalorder %s11, 0
    %p73 = por %p71, %p72
    %p74 = scmp.ne.s32.totalorder %s66, %s68
    %p75 = scmp.eq.s32.totalorder %s16, 1
    %p76 = por %p74, %p75
    %p77 = scmp.ne.s32.totalorder %s68, %s69
    %p78 = scmp.eq.s32.totalorder %s16, 0
    %p79 = por %p77, %p78
    %p80 = scmp.ne.s32.totalorder %s68, %s69
    %p81 = scmp.eq.s32.totalorder %s17, 1
    %p82 = por %p80, %p81
    %p84 = scmp.ne.s32.totalorder %s69, %s83
    %p85 = scmp.eq.s32.totalorder %s17, 0
    %p86 = por %p84, %p85
    %s87 = ssub.s32 %s11, %s18
    %p88 = scmp.eq.s32.totalorder %s87, 0
    %s90 = sadd.s32 %s89, 1
    %s91 = scalar_select %p88, %s89, %s90
    %p94 = pneg %p88
    %p95 = scmp.eq.s32.totalorder %s11, 1
    %p96 = por %p94, %p95
    %p97 = scmp.ne.s32.totalorder %s89, %s92
    %p98 = scmp.eq.s32.totalorder %s11, 0
    %p99 = por %p97, %p98
    %p100 = scmp.ne.s32.totalorder %s89, %s92
    %p101 = scmp.eq.s32.totalorder %s16, 1
    %p102 = por %p100, %p101
    %p103 = scmp.ne.s32.totalorder %s92, %s93
    %p104 = scmp.eq.s32.totalorder %s16, 0
    %p105 = por %p103, %p104
    %p106 = scmp.ne.s32.totalorder %s92, %s93
    %p107 = scmp.eq.s32.totalorder %s17, 1
    %p108 = por %p106, %p107
    %p110 = scmp.ne.s32.totalorder %s93, %s109
    %p111 = scmp.eq.s32.totalorder %s17, 0
    %p112 = por %p110, %p111
    %s113 = ssub.s32 %s11, %s18
    %p114 = scmp.eq.s32.totalorder %s113, 0
    %s116 = sadd.s32 %s115, 1
    %s117 = scalar_select %p114, %s115, %s116
    %p120 = pneg %p114
    %p121 = scmp.eq.s32.totalorder %s11, 1
    %p122 = por %p120, %p121
    %p123 = scmp.ne.s32.totalorder %s115, %s118
    %p124 = scmp.eq.s32.totalorder %s11, 0
    %p125 = por %p123, %p124
    %p126 = scmp.ne.s32.totalorder %s115, %s118
    %p127 = scmp.eq.s32.totalorder %s16, 1
    %p128 = por %p126, %p127
    %p129 = scmp.ne.s32.totalorder %s118, %s119
    %p130 = scmp.eq.s32.totalorder %s16, 0
    %p131 = por %p129, %p130
    %p132 = scmp.ne.s32.totalorder %s118, %s119
    %p133 = scmp.eq.s32.totalorder %s17, 1
    %p134 = por %p132, %p133
    %p136 = scmp.ne.s32.totalorder %s119, %s135
    %p137 = scmp.eq.s32.totalorder %s17, 0
    %p138 = por %p136, %p137
    %s139 = ssub.s32 %s11, %s18
    %p140 = scmp.eq.s32.totalorder %s139, 0
    %s142 = sadd.s32 %s141, 1
    %s143 = scalar_select %p140, %s141, %s142
    %p146 = pneg %p140
    %p147 = scmp.eq.s32.totalorder %s11, 1
    %p148 = por %p146, %p147
    %p149 = scmp.ne.s32.totalorder %s141, %s144
    %p150 = scmp.eq.s32.totalorder %s11, 0
    %p151 = por %p149, %p150
    %p152 = scmp.ne.s32.totalorder %s141, %s144
    %p153 = scmp.eq.s32.totalorder %s16, 1
    %p154 = por %p152, %p153
    %p155 = scmp.ne.s32.totalorder %s144, %s145
    %p156 = scmp.eq.s32.totalorder %s16, 0
    %p157 = por %p155, %p156
    %p158 = scmp.ne.s32.totalorder %s144, %s145
    %p159 = scmp.eq.s32.totalorder %s17, 1
    %p160 = por %p158, %p159
    %p162 = scmp.ne.s32.totalorder %s145, %s161
    %p163 = scmp.eq.s32.totalorder %s17, 0
    %p164 = por %p162, %p163
    %p165 = scmp.le.s32.totalorder 1, %s11
    %p166 = scmp.lt.s32.totalorder %s11, 3
    %p167 = pnand %p165, %p166
    %p168 = pneg %p167
    // Predicated region
    $region9: #{distillation_loss.1} parent=5 // pred_check
      _
    $region10: #{distillation_loss.1} parent=5 // pred_check_branch
      %170 = sbr.rel (%p167) target = $region12
    $region11: #{distillation_loss.1} parent=5 // pred_region
      %s171 = ssub.s32 %s11, 1
      // Predicated region
      $region13: #{distillation_loss.1} parent=11 // pred_check
        %p172 = pneg %p58
      $region14: #{distillation_loss.1} parent=11 // pred_check_branch
        %174 = sbr.rel (%p172) target = $region16
      $region15: #{distillation_loss.1} parent=11 // pred_region
        _
      $region16: #{distillation_loss.1} parent=11 // pred_fallthru
        _
      // Predicated region
      $region17: #{distillation_loss.1} parent=11 // pred_check
        %p175 = pneg %p79
      $region18: #{distillation_loss.1} parent=11 // pred_check_branch
        %177 = sbr.rel (%p175) target = $region20
      $region19: #{distillation_loss.1} parent=11 // pred_region
        _
      $region20: #{distillation_loss.1} parent=11 // pred_fallthru
        _
    $region12: #{distillation_loss.1} parent=5 // pred_fallthru
      _
    %p178 = scmp.lt.s32.totalorder %s11, 2
    // Predicated region
    $region21: #{distillation_loss.1} parent=5 // pred_check
      %p179 = pneg %p178
    $region22: #{distillation_loss.1} parent=5 // pred_check_branch
      %181 = sbr.rel (%p179) target = $region24
    $region23: #{distillation_loss.1} parent=5 // pred_region
      // Predicated region
      $region25: #{distillation_loss.1} parent=23 // pred_check
        %p182 = pneg %p31
      $region26: #{distillation_loss.1} parent=23 // pred_check_branch
        %184 = sbr.rel (%p182) target = $region28
      $region27: #{distillation_loss.1} parent=23 // pred_region
        %s185 = smul.u32 2, %s11
        %p186 = scmp.lt.s32.totalorder %s185, 3
        %s187 = scalar_select %p186, %s185, 3
        %s188 = smul.addr %s187, 8
        %s189 = scalar_lea.vmem %s0, %s188
        %s190 = smul.u32 2, %s11
      $region28: #{distillation_loss.1} parent=23 // pred_fallthru
        _
      // Predicated region
      $region29: #{distillation_loss.1} parent=23 // pred_check
        %p191 = pneg %p99
      $region30: #{distillation_loss.1} parent=23 // pred_check_branch
        %193 = sbr.rel (%p191) target = $region32
      $region31: #{distillation_loss.1} parent=23 // pred_region
        %s194 = smul.u32 2, %s11
        %p195 = scmp.lt.s32.totalorder %s194, 3
        %s196 = scalar_select %p195, %s194, 3
        %s197 = smul.addr %s196, 8
        %s198 = scalar_lea.vmem %s3, %s197
        %s199 = smul.u32 2, %s11
      $region32: #{distillation_loss.1} parent=23 // pred_fallthru
        _
      // Predicated region
      $region33: #{distillation_loss.1} parent=23 // pred_check
        %p200 = pneg %p125
      $region34: #{distillation_loss.1} parent=23 // pred_check_branch
        %202 = sbr.rel (%p200) target = $region36
      $region35: #{distillation_loss.1} parent=23 // pred_region
        %s203 = smul.u32 2, %s11
        %p204 = scmp.lt.s32.totalorder %s203, 3
        %s205 = scalar_select %p204, %s203, 3
        %s206 = smul.addr %s205, 8
        %s207 = scalar_lea.vmem %s4, %s206
        %s208 = smul.u32 2, %s11
      $region36: #{distillation_loss.1} parent=23 // pred_fallthru
        _
    $region24: #{distillation_loss.1} parent=5 // pred_fallthru
      _
    %p209 = scmp.le.s32.totalorder 1, %s11
    %p210 = scmp.lt.s32.totalorder %s11, 3
    %p211 = pnand %p209, %p210
    %p212 = pneg %p211
    // Predicated region
    $region37: #{distillation_loss.1} parent=5 // pred_check
      _
    $region38: #{distillation_loss.1} parent=5 // pred_check_branch
      %214 = sbr.rel (%p211) target = $region40
    $region39: #{distillation_loss.1} parent=5 // pred_region
      %s215 = ssub.s32 %s11, 1
      %s216 = smul.u32 2, %s16
      %p217 = scmp.lt.s32.totalorder %s216, 3
      %s218 = scalar_select %p217, %s216, 3
      %s219 = smul.addr %s218, 8
      %s220 = scalar_lea.vmem %s0, %s219
      %p221 = pneg %p37
      %p222 = pneg %p34
      %p223 = pneg %p58
      %p224 = pneg %p55
      %p225 = pneg %p79
      %p226 = pneg %p76
      %s227 = smul.u32 2, %s16
      %p228 = scmp.lt.s32.totalorder %s227, 3
      %s229 = scalar_select %p228, %s227, 3
      %s230 = smul.addr %s229, 8
      %s231 = scalar_lea.vmem %s3, %s230
      %p232 = pneg %p105
      %p233 = pneg %p102
      %s234 = smul.u32 2, %s16
      %p235 = scmp.lt.s32.totalorder %s234, 3
      %s236 = scalar_select %p235, %s234, 3
      %s237 = smul.addr %s236, 8
      %s238 = scalar_lea.vmem %s4, %s237
      %p239 = pneg %p131
      %p240 = pneg %p128
      %p241 = pneg %p157
      %p242 = pneg %p154
      %p243 = scmp.lt.s32.totalorder %s16, 1
      %s244 = scalar_select %p243, %s16, 1
      %s245 = scalar_lea.vmem %s5, %s244
      %s246 = smul.u32 2, %s16
      %p247 = scmp.lt.s32.totalorder %s246, 3
      %s248 = scalar_select %p247, %s246, 3
      %s249 = smul.addr %s248, 8
      %s250 = scalar_lea.vmem %s0, %s249
      %s251 = smul.u32 2, %s16
      %s252 = smul.u32 2, %s16
      %p253 = scmp.lt.s32.totalorder %s252, 3
      %s254 = scalar_select %p253, %s252, 3
      %s255 = smul.addr %s254, 8
      %s256 = scalar_lea.vmem %s3, %s255
      %s257 = smul.u32 2, %s16
      %s258 = smul.u32 2, %s16
      %p259 = scmp.lt.s32.totalorder %s258, 3
      %s260 = scalar_select %p259, %s258, 3
      %s261 = smul.addr %s260, 8
      %s262 = scalar_lea.vmem %s4, %s261
      %s263 = smul.u32 2, %s16
      %p264 = scmp.lt.s32.totalorder %s16, 1
      %s265 = scalar_select %p264, %s16, 1
      %s266 = scalar_lea.vmem %s5, %s265
      %v268 = vld [vmem:[%s250] sm:$0xff]
      %v269 = vld [vmem:[%s250 + $0x8] sm:$0xff]
      %v270 = vld [vmem:[%s1] sm:$0xff]
      %v271 = vld [vmem:[%s1 + $0x8] sm:$0xff]
      %v272 = vld [vmem:[%s1 + $0x10] sm:$0xff]
      %v273 = vld [vmem:[%s1 + $0x18] sm:$0xff]
      %v274 = vld [vmem:[%s2] sm:$0x1]
      %v275 = vld [vmem:[%s256] sm:$0xff]
      %v276 = vld [vmem:[%s256 + $0x8] sm:$0xff]
      %v277 = vld [vmem:[%s262] sm:$0xff]
      %v278 = vld [vmem:[%s262 + $0x8] sm:$0xff]
      %v279 = vpack.c.bf16 %v269, %v268
      %v280 = vpack.c.bf16 %v271, %v270
      %v281 = vpack.c.bf16 %v273, %v272
      %v283 = vlaneseq
      %v284 = vshrl.u32 %v283, 7
      %v285 = vsub.s32 0, %v284
      %v286 = vrot.slane %v274, %v285
      %vm288 = vcmask 261120
      %v290 = vsel %vm288, %v279, 0
      %292 = vmatprep.subr.bf16.mxu0 0
      %293 = vmatpush1.bf16.msra.mxu0 %v280
      %294 = vmatprep.subr.bf16.mxu0 0
      %295 = vmatpush1.bf16.msra.mxu0 %v281
      %296 = vmatprep.subr.bf16.mxu0 0
      %297 = vmatpush1.bf16.msra.mxu0 0
      %298 = vmatprep.subr.bf16.mxu0 0
      %299 = vmatpush1.bf16.msra.mxu0 0
      %300 = vmatprep.subr.bf16.mxu0 0
      %301 = vmatpush1.bf16.msra.mxu0 0
      %302 = vmatprep.subr.bf16.mxu0 0
      %303 = vmatpush1.bf16.msra.mxu0 0
      %304 = vmatprep.subr.bf16.mxu0 0
      %305 = vmatpush1.bf16.msra.mxu0 0
      %306 = vmatprep.subr.bf16.mxu0 0
      %307 = vmatpush1.bf16.msra.mxu0 0
      %308 = vmatprep.subr.bf16.mxu0 0
      %309 = vmatpush1.bf16.msra.mxu0 0
      %310 = vmatprep.subr.bf16.mxu0 0
      %311 = vmatpush1.bf16.msra.mxu0 0
      %312 = vmatprep.subr.bf16.mxu0 0
      %313 = vmatpush1.bf16.msra.mxu0 0
      %314 = vmatprep.subr.bf16.mxu0 0
      %315 = vmatpush1.bf16.msra.mxu0 0
      %316 = vmatprep.subr.bf16.mxu0 0
      %317 = vmatpush1.bf16.msra.mxu0 0
      %318 = vmatprep.subr.bf16.mxu0 0
      %319 = vmatpush1.bf16.msra.mxu0 0
      %320 = vmatprep.subr.bf16.mxu0 0
      %321 = vmatpush1.bf16.msra.mxu0 0
      %322 = vmatprep.subr.bf16.mxu0 0
      %323 = vmatpush1.bf16.msra.mxu0 0
      %324 = vmatprep.mubr.bf16.mxu0 0
      %325 = vmatmul.mubr.bf16.gmra.mrb[0].mxu0 %v290
      %v326 = vpop.f32.mrb[0].mxu0
      %v327 = vadd.f32 %v286, %v326
      %v328 = vpop.f32.mrb[0].mxu0
      %v329 = vpop.f32.mrb[0].mxu0
      %v330 = vadd.f32 %v286, %v329
      %v331 = vpop.f32.mrb[0].mxu0
      %332 = vdwg.mxu0
      %v333 = vlaneseq
      %v334 = vand.u32 %v333, 127
      %v335 = vlaneseq
      %v336 = vshrl.u32 %v335, 7
      %v337 = vadd.s32 %v336, 8
      %s338 = smul.u32 %s16, 16
      %v339 = vstv %s338
      %v340 = vadd.s32 %v339, %v336
      %v341 = vadd.s32 %v339, %v337
      %vm342 = vcmp.lt.s32.totalorder %v340, 24
      %vm343 = vcmp.lt.s32.totalorder %v341, 24
      %v344 = vsel %vm342, 1, 0
      %v345 = vsel %vm343, 1, 0
      %v346 = vcvt.s32.f32 %v344
      %v347 = vcvt.s32.f32 %v345
      %vm348 = vcmask 130048
      %v349 = vsel %vm348, %v275, -inf
      %350 = vmax.xlane.f32.xlu0 %v349
      %v351 = vpop.xlane.xlu0 %350
      %v352 = vsel %vm348, %v276, -inf
      %353 = vmax.xlane.f32.xlu0 %v352
      %v354 = vpop.xlane.xlu0 %353
      %v355 = vsub.f32 %v275, %v351
      %v356 = vsub.f32 %v276, %v354
      %v357 = vmul.f32 %v355, 1.442695
      %v358 = vpow.pop %v357
      %v359 = vmul.f32 %v356, 1.442695
      %v360 = vpow.pop %v359
      %v361 = vsel %vm348, %v358, 0.0
      %362 = vadd.xlane.f32.xlu0 %v361
      %v363 = vpop.xlane.xlu0 %362
      %v364 = vsel %vm348, %v360, 0.0
      %365 = vadd.xlane.f32.xlu0 %v364
      %v366 = vpop.xlane.xlu0 %365
      %v367 = vlog2.pop %v363
      %v368 = vmul.f32 %v367, 0.6931472
      %v369 = vlog2.pop %v366
      %v370 = vmul.f32 %v369, 0.6931472
      %v371 = vadd.f32 %v351, %v368
      %v372 = vadd.f32 %v354, %v370
      %373 = vset.pattern.permute.xlu0 0
      %374 = vperm.xlu0 %373, %v277
      %v375 = vpop.permute.xlu0 %374
      %376 = vset.pattern.permute.xlu0 0
      %377 = vperm.xlu0 %376, %v278
      %v378 = vpop.permute.xlu0 %377
      %vm379 = vcmp.eq.s32.totalorder %v334, %v375
      %vm380 = vcmp.eq.s32.totalorder %v334, %v378
      %v381 = vsel %vm379, 1, 0
      %v382 = vsel %vm380, 1, 0
      %v383 = vcvt.s32.f32 %v381
      %v384 = vcvt.s32.f32 %v382
      %v385 = vmul.f32 %v383, %v275
      %v386 = vmul.f32 %v384, %v276
      %v387 = vsel %vm348, %v385, 0.0
      %388 = vadd.xlane.f32.xlu0 %v387
      %v389 = vpop.xlane.xlu0 %388
      %v390 = vsel %vm348, %v386, 0.0
      %391 = vadd.xlane.f32.xlu0 %v390
      %v392 = vpop.xlane.xlu0 %391
      %v393 = vsub.f32 %v371, %v389
      %v394 = vsub.f32 %v372, %v392
      %v395 = vmul.f32 %v393, %v346
      %v396 = vmul.f32 %v394, %v347
      %vm397 = vcmask 7168
      %v398 = vsel %vm397, %v395, 0.0
      %v399 = vsel %vm397, %v396, 0.0
      %v400 = vadd.f32 %v398, %v399
      %401 = vadd.xlane.f32.xlu0 %v400
      %v402 = vpop.xlane.xlu0 %401
      %v403 = vrot.slane %v402, 4
      %v404 = vadd.f32 %v402, %v403
      %v405 = vrot.slane %v404, 2
      %v406 = vadd.f32 %v404, %v405
      %v407 = vrot.slane %v406, 1
      %v408 = vadd.f32 %v406, %v407
      %s409 = vtos %v408
      %s410 = smul.f32 %s409, 0.041666668
      %v411 = vmul.f32 %v275, 0.5
      %v412 = vmul.f32 %v276, 0.5
      %v413 = vmul.f32 %v327, 0.5
      %v414 = vmul.f32 %v330, 0.5
      %v415 = vsel %vm348, %v411, -inf
      %416 = vmax.xlane.f32.xlu0 %v415
      %v417 = vpop.xlane.xlu0 %416
      %v418 = vsel %vm348, %v412, -inf
      %419 = vmax.xlane.f32.xlu0 %v418
      %v420 = vpop.xlane.xlu0 %419
      %v421 = vsub.f32 %v411, %v417
      %v422 = vsub.f32 %v412, %v420
      %v423 = vmul.f32 %v421, 1.442695
      %v424 = vpow.pop %v423
      %v425 = vmul.f32 %v422, 1.442695
      %v426 = vpow.pop %v425
      %v427 = vsel %vm348, %v424, 0.0
      %428 = vadd.xlane.f32.xlu0 %v427
      %v429 = vpop.xlane.xlu0 %428
      %v430 = vsel %vm348, %v426, 0.0
      %431 = vadd.xlane.f32.xlu0 %v430
      %v432 = vpop.xlane.xlu0 %431
      %v433 = vlog2.pop %v429
      %v434 = vmul.f32 %v433, 0.6931472
      %v435 = vlog2.pop %v432
      %v436 = vmul.f32 %v435, 0.6931472
      %v437 = vsub.f32 %v421, %v434
      %v438 = vsub.f32 %v422, %v436
      %v439 = vsel %vm348, %v413, -inf
      %440 = vmax.xlane.f32.xlu0 %v439
      %v441 = vpop.xlane.xlu0 %440
      %v442 = vsel %vm348, %v414, -inf
      %443 = vmax.xlane.f32.xlu0 %v442
      %v444 = vpop.xlane.xlu0 %443
      %v445 = vsub.f32 %v413, %v441
      %v446 = vsub.f32 %v414, %v444
      %v447 = vmul.f32 %v445, 1.442695
      %v448 = vpow.pop %v447
      %v449 = vmul.f32 %v446, 1.442695
      %v450 = vpow.pop %v449
      %v451 = vsel %vm348, %v448, 0.0
      %452 = vadd.xlane.f32.xlu0 %v451
      %v453 = vpop.xlane.xlu0 %452
      %v454 = vsel %vm348, %v450, 0.0
      %455 = vadd.xlane.f32.xlu0 %v454
      %v456 = vpop.xlane.xlu0 %455
      %v457 = vlog2.pop %v453
      %v458 = vmul.f32 %v457, 0.6931472
      %v459 = vlog2.pop %v456
      %v460 = vmul.f32 %v459, 0.6931472
      %v461 = vsub.f32 %v445, %v458
      %v462 = vsub.f32 %v446, %v460
      %v463 = vrcp.pop %v453
      %v464 = vrcp.pop %v456
      %v465 = vmul.f32 %v448, %v463
      %v466 = vmul.f32 %v450, %v464
      %v467 = vsub.f32 %v461, %v437
      %v468 = vsub.f32 %v462, %v438
      %v469 = vmul.f32 %v465, %v467
      %v470 = vmul.f32 %v466, %v468
      %v471 = vsel %vm348, %v469, 0.0
      %472 = vadd.xlane.f32.xlu0 %v471
      %v473 = vpop.xlane.xlu0 %472
      %v474 = vsel %vm348, %v470, 0.0
      %475 = vadd.xlane.f32.xlu0 %v474
      %v476 = vpop.xlane.xlu0 %475
      %v477 = vmul.f32 %v473, %v346
      %v478 = vmul.f32 %v476, %v347
      %v479 = vsel %vm397, %v477, 0.0
      %v480 = vsel %vm397, %v478, 0.0
      %v481 = vadd.f32 %v479, %v480
      %482 = vadd.xlane.f32.xlu0 %v481
      %v483 = vpop.xlane.xlu0 %482
      %v484 = vrot.slane %v483, 4
      %v485 = vadd.f32 %v483, %v484
      %v486 = vrot.slane %v485, 2
      %v487 = vadd.f32 %v485, %v486
      %v488 = vrot.slane %v487, 1
      %v489 = vadd.f32 %v487, %v488
      %s490 = vtos %v489
      %s491 = smul.f32 %s490, 0.010416667
      %vm492 = vcmp.eq.s32.totalorder %v334, 0
      %v493 = vstv %s410
      %v494 = vsel %vm492, %v493, 0.0
      %vm495 = vcmp.eq.s32.totalorder %v334, 1
      %v496 = vstv %s491
      %v497 = vsel %vm495, %v496, 0.0
      %v498 = vadd.f32 %v494, %v497
      %499 = vst [vmem:[%s266] sm:$0x1] %v498
      %p500 = scmp.lt.s32.totalorder %s16, 1
      %s501 = scalar_select %p500, %s16, 1
      %s502 = scalar_lea.vmem %s5, %s501
      // Predicated region
      $region41: #{distillation_loss.1} parent=39 // pred_check
        %p503 = pneg %p154
      $region42: #{distillation_loss.1} parent=39 // pred_check_branch
        %505 = sbr.rel (%p503) target = $region44
      $region43: #{distillation_loss.1} parent=39 // pred_region
        _
      $region44: #{distillation_loss.1} parent=39 // pred_fallthru
        _
    $region40: #{distillation_loss.1} parent=5 // pred_fallthru
      _
    %p506 = scmp.le.s32.totalorder 2, %s11
    // Predicated region
    $region45: #{distillation_loss.1} parent=5 // pred_check
      %p507 = pneg %p506
    $region46: #{distillation_loss.1} parent=5 // pred_check_branch
      %509 = sbr.rel (%p507) target = $region48
    $region47: #{distillation_loss.1} parent=5 // pred_region
      %s510 = ssub.s32 %s11, 2
      // Predicated region
      $region49: #{distillation_loss.1} parent=47 // pred_check
        %p511 = pneg %p160
      $region50: #{distillation_loss.1} parent=47 // pred_check_branch
        %513 = sbr.rel (%p511) target = $region52
      $region51: #{distillation_loss.1} parent=47 // pred_region
        %p514 = scmp.lt.s32.totalorder %s17, 1
        %s515 = scalar_select %p514, %s17, 1
        %s516 = scalar_lea.vmem %s5, %s515
      $region52: #{distillation_loss.1} parent=47 // pred_fallthru
        _
    $region48: #{distillation_loss.1} parent=5 // pred_fallthru
      _
  $region6: #{distillation_loss.1} parent=0 // loop_footer
    %s15 = sadd.s32 1, %s11
  $region7: #{distillation_loss.1} parent=0 // loop_footer_branch
    %10 = sbr.rel target = $region3
  $region8: #{distillation_loss.1} parent=0 // loop_exit
    _

</llo_original>
